<compile_context>
chip_gen: v5e
topology: v5e:2x2
jax: 0.10.0
libtpu: 0.0.40
codegen_flags: <defaults>
</compile_context>

<pallas_src>
import math
import numpy as np
import jax
import jax.numpy as jnp
from jax.experimental import pallas as pl
from jax.experimental.pallas import tpu as pltpu

F32_EPS = float(np.finfo(np.float32).eps)
_EPS = 1e-12          # epsilon inside the logs (matches the PyTorch module)
_ACC_ROWS = 8         # accumulator sublane height (one 8-sublane vreg group)
_MAX_TILE_ROWS = 512  # bounds the unrolled row-group-sum (<= 64 vreg-group adds)


def _round_up(x, m):
    return (x + m - 1) // m * m


# ----------------------------------------------------------------------------
# Host-side target construction (faithful numpy port of the torch code).
# ----------------------------------------------------------------------------
def gaussian_radius(det_size, min_overlap):
    height, width = det_size
    a1 = 1
    b1 = height + width
    c1 = width * height * (1 - min_overlap) / (1 + min_overlap)
    sq1 = math.sqrt(b1 ** 2 - 4 * a1 * c1)
    r1 = (b1 - sq1) / (2 * a1)
    a2 = 4
    b2 = 2 * (height + width)
    c2 = (1 - min_overlap) * width * height
    sq2 = math.sqrt(b2 ** 2 - 4 * a2 * c2)
    r2 = (b2 - sq2) / (2 * a2)
    a3 = 4 * min_overlap
    b3 = -2 * min_overlap * (height + width)
    c3 = (min_overlap - 1) * width * height
    sq3 = math.sqrt(b3 ** 2 - 4 * a3 * c3)
    r3 = (b3 + sq3) / (2 * a3)
    return min(r1, r2, r3)


def gaussian_target(heatmap, center, radius, k=1):
    diameter = 2 * radius + 1
    x = np.arange(-radius, radius + 1, dtype=heatmap.dtype).reshape(1, -1)
    y = np.arange(-radius, radius + 1, dtype=heatmap.dtype).reshape(-1, 1)
    kernel = np.exp(-(x * x + y * y) / (2 * diameter / 6 * diameter / 6))
    kernel[kernel < np.finfo(heatmap.dtype).eps * kernel.max()] = 0
    cx, cy = center
    height, width = heatmap.shape[:2]
    left, right = min(cx, radius), min(width - cx, radius + 1)
    top, bottom = min(cy, radius), min(height - cy, radius + 1)
    masked_heatmap = heatmap[cy - top:cy + bottom, cx - left:cx + right]
    masked_gaussian = kernel[radius - top:radius + bottom, radius - left:radius + right]
    np.maximum(masked_heatmap, masked_gaussian * k,
               out=heatmap[cy - top:cy + bottom, cx - left:cx + right])
    return heatmap


def build_targets(targets, shape, input_size, num_classes):
    b, _, h, w = shape
    w_ratio = float(w / input_size)
    h_ratio = float(h / input_size)
    wh_true = np.zeros((b, 2, h, w), dtype=np.float32)
    offset_true = np.zeros((b, 2, h, w), dtype=np.float32)
    center_true = np.zeros((b, num_classes, h, w), dtype=np.float32)
    wh_offset_weight = np.zeros((b, 2, h, w), dtype=np.float32)
    for i, target in enumerate(targets):
        boxes = target[:, 1:].astype(np.float32)
        label = target[:, 0].astype(np.int64)
        centers_x = (boxes[:, 0] + boxes[:, 2]) * w_ratio / 2
        centers_y = (boxes[:, 1] + boxes[:, 3]) * h_ratio / 2
        for j in range(boxes.shape[0]):
            center_x = float(centers_x[j])
            center_y = float(centers_y[j])
            c_x_int, c_y_int = int(center_x), int(center_y)
            scale_box_h = float((boxes[j][3] - boxes[j][1]) * h_ratio)
            scale_box_w = float((boxes[j][2] - boxes[j][0]) * w_ratio)
            radius = gaussian_radius([scale_box_h, scale_box_w], min_overlap=0.3)
            radius = max(0, int(radius))
            gaussian_target(center_true[i, label[j]], [c_x_int, c_y_int], radius)
            wh_true[i, 0, c_y_int, c_x_int] = scale_box_w
            wh_true[i, 1, c_y_int, c_x_int] = scale_box_h
            offset_true[i, 0, c_y_int, c_x_int] = center_x - c_x_int
            offset_true[i, 1, c_y_int, c_x_int] = center_y - c_y_int
            wh_offset_weight[i, :, c_y_int, c_x_int] = 1
    return center_true, wh_true, offset_true, wh_offset_weight


# ----------------------------------------------------------------------------
# Hardware queries (guarded; conservative fallbacks).
# ----------------------------------------------------------------------------
def _vmem_capacity_bytes():
    try:
        info = pltpu.get_tpu_info()
        cap = getattr(info, "vmem_capacity_bytes", None)
        if cap:
            return int(cap)
    except Exception:
        pass
    return 64 << 20       # conservative: v7x per-TC VMEM


def _num_tensorcores():
    try:
        dev = jax.local_devices()[0]
        n = getattr(dev, "num_cores", None)
        if isinstance(n, int) and n >= 1:
            return max(1, min(n, 2))
        kind = str(getattr(dev, "device_kind", "")).lower()
        if "v7" in kind:
            return 2
    except Exception:
        pass
    return 1              # single-TC default (v5e / v6e)


# ----------------------------------------------------------------------------
# Tile planning: adaptive block sizing under a VMEM budget.
# ----------------------------------------------------------------------------
def _plan_tiles(rows_c, rows_l1, hw, ncores):
    vmem_cap = _vmem_capacity_bytes()
    vmem_budget = (vmem_cap * 3) // 4                     # 0.75x physical
    target_block = (4 << 20) if vmem_cap >= (96 << 20) else (2 << 20)
    row_bytes = hw * 4

    rows_c8 = _round_up(max(rows_c, 1), _ACC_ROWS)
    tile_rows = (target_block // row_bytes) // _ACC_ROWS * _ACC_ROWS
    tile_rows = max(_ACC_ROWS, min(_MAX_TILE_ROWS, tile_rows))
    tile_rows = min(tile_rows, rows_c8)

    # Tiny problem: everything fits in one tile -> single grid point.
    ncores_eff = 1 if rows_c8 <= tile_rows else max(1, ncores)

    def _layout(tr):
        steps = pl.cdiv(rows_c, ncores_eff * tr)
        tr = _round_up(pl.cdiv(rows_c, ncores_eff * steps), _ACC_ROWS)
        l1_tile = _round_up(pl.cdiv(rows_l1, ncores_eff * steps), _ACC_ROWS)
        l1_steps = pl.cdiv(rows_l1, ncores_eff * l1_tile)
        return steps, tr, l1_steps, l1_tile

    def _needed(tr, lt):
        return (2 * 2 * tr * row_bytes       # 2 center streams, double-buffered
                + 5 * 2 * lt * row_bytes     # 5 L1 streams, double-buffered
                + 3 * _ACC_ROWS * row_bytes  # f32 accumulators
                + (4 << 20))                 # compiler-internal headroom

    steps, tile_rows, l1_steps, l1_tile = _layout(tile_rows)
    while _needed(tile_rows, l1_tile) > vmem_budget and tile_rows > _ACC_ROWS:
        tile_rows = max(_ACC_ROWS, (tile_rows // 2) // _ACC_ROWS * _ACC_ROWS)
        steps, tile_rows, l1_steps, l1_tile = _layout(tile_rows)

    vmem_limit = int(min(vmem_budget, max(_needed(tile_rows, l1_tile), 32 << 20)))
    return ncores_eff, steps, tile_rows, l1_steps, l1_tile, vmem_limit


# ----------------------------------------------------------------------------
# Pallas kernel.
# ----------------------------------------------------------------------------
def _row_group_sum(x):
    """(R, L) -> (8, L): sum consecutive 8-row groups with pure VPU adds.

    Uses explicit static slices (tile-aligned on the sublane axis) rather
    than a reshape, so no relayout / materialized copy is possible.
    R must be a multiple of 8.
    """
    r = x.shape[0]
    acc = x[0:_ACC_ROWS, :]
    for i in range(1, r // _ACC_ROWS):
        acc = acc + x[i * _ACC_ROWS:(i + 1) * _ACC_ROWS, :]
    return acc


def _make_kernel(l1_steps):
    def kernel(co_ref, ct_ref, who_ref, wht_ref, ofo_ref, oft_ref, w_ref,
               out_ref, acc_center, acc_pos, acc_l1):
        s = pl.program_id(1)                 # row-tile / reduction axis
        n_s = pl.num_programs(1)

        @pl.when(s == 0)
        def _init():
            acc_center[...] = jnp.zeros_like(acc_center)
            acc_pos[...] = jnp.zeros_like(acc_pos)
            acc_l1[...] = jnp.zeros_like(acc_l1)

        # ---- Weighted-L1 branch: streamed over the first l1_steps steps
        # (overlapped with the center compute, split across both cores).
        # The 0.1 (wh) / 1.0 (offset) loss weights are applied in-register so
        # wh_offset_weight is read from HBM only once.
        @pl.when(s < l1_steps)
        def _l1():
            l1 = (jnp.float32(0.1) * jnp.abs(who_ref[...] - wht_ref[...])
                  + jnp.abs(ofo_ref[...] - oft_ref[...])) * w_ref[...]
            acc_l1[...] += _row_group_sum(l1)

        # ---- Gaussian focal loss (alpha=2, gamma=4) on the center tile.
        # Single transcendental per element: the log argument and coefficient
        # are selected by positivity.  Exact vs. the reference: at t==1 the
        # neg term's weight (1-t)^4 is exactly 0; elsewhere the pos weight is 0.
        o = co_ref[...]
        t = ct_ref[...]
        pos = t == 1.0                                    # target.eq(1)
        one_minus_o = 1.0 - o
        one_minus_t = 1.0 - t
        neg_w = (one_minus_t * one_minus_t) * (one_minus_t * one_minus_t)
        log_arg = jnp.where(pos, o, one_minus_o)
        coef = jnp.where(pos, one_minus_o * one_minus_o, o * o * neg_w)
        focal = -jnp.log(log_arg + _EPS) * coef

        acc_center[...] += _row_group_sum(focal)
        acc_pos[...] += _row_group_sum(pos.astype(jnp.float32))

        # ---- Finalize this core's partials: one cross-lane reduction per
        # sum, lane-dense (1, 128) unmasked store.
        @pl.when(s == n_s - 1)
        def _fin():
            c_sum = jnp.sum(acc_center[...])
            p_cnt = jnp.sum(acc_pos[...])
            l_sum = jnp.sum(acc_l1[...])
            lane = jax.lax.broadcasted_iota(jnp.int32, (1, 128), 1)
            out_ref[...] = jnp.where(lane == 0, c_sum,
                           jnp.where(lane == 1, p_cnt,
                           jnp.where(lane == 2, l_sum, 0.0)))

    return kernel


@jax.jit
def compute_loss_pallas(center_out, wh_out, off_out,
                        center_true, wh_true, off_true, wh_offset_weight):
    n, c, h, w = center_out.shape
    hw = h * w

    def flat(x):
        return jnp.asarray(x, jnp.float32).reshape(x.shape[0] * x.shape[1], hw)

    # Kept f32: the positive mask relies on exact t == 1.0 and (1-t)^4 drifts
    # in bf16 beyond the verification tolerance.
    co, ct = flat(center_out), flat(center_true)
    who, wht = flat(wh_out), flat(wh_true)
    ofo, oft = flat(off_out), flat(off_true)
    wgt = flat(wh_offset_weight)

    rows_c = co.shape[0]          # N * C
    rows_l1 = who.shape[0]        # N * 2

    ncores, steps, tile_rows, l1_steps, l1_tile, vmem_limit = _plan_tiles(
        rows_c, rows_l1, hw, _num_tensorcores())

    rows_c_pad = ncores * steps * tile_rows
    rows_l1_pad = ncores * l1_steps * l1_tile

    def pad_rows(x, total):
        extra = total - x.shape[0]
        return jnp.pad(x, ((0, extra), (0, 0))) if extra else x

    # Zero padding is loss-neutral: focal term of (o=0,t=0) is exactly 0, and
    # padded weight rows are 0.
    co, ct = pad_rows(co, rows_c_pad), pad_rows(ct, rows_c_pad)
    who, wht = pad_rows(who, rows_l1_pad), pad_rows(wht, rows_l1_pad)
    ofo, oft = pad_rows(ofo, rows_l1_pad), pad_rows(oft, rows_l1_pad)
    wgt = pad_rows(wgt, rows_l1_pad)

    center_spec = pl.BlockSpec((tile_rows, hw), lambda p, s: (p * steps + s, 0))
    # L1 blocks: distinct blocks only while s < l1_steps; afterwards the index
    # is constant so the pipeline stops re-fetching them.
    l1_spec = pl.BlockSpec(
        (l1_tile, hw),
        lambda p, s: (p * l1_steps + jnp.minimum(s, l1_steps - 1), 0))
    out_spec = pl.BlockSpec((1, 128), lambda p, s: (0, p))

    partials = pl.pallas_call(
        _make_kernel(l1_steps),
        out_shape=jax.ShapeDtypeStruct((1, ncores * 128), jnp.float32),
        grid_spec=pltpu.PrefetchScalarGridSpec(
            num_scalar_prefetch=0,
            grid=(ncores, steps),
            in_specs=[center_spec, center_spec,
                      l1_spec, l1_spec, l1_spec, l1_spec, l1_spec],
            out_specs=out_spec,
            scratch_shapes=[pltpu.VMEM((_ACC_ROWS, hw), jnp.float32)] * 3),
        compiler_params=pltpu.CompilerParams(
            dimension_semantics=("parallel", "arbitrary"),
            vmem_limit_bytes=vmem_limit),
    )(co, ct, who, wht, ofo, oft, wgt)

    partials = partials.reshape(ncores, 128)
    center_sum = jnp.sum(partials[:, 0])
    pos_cnt = jnp.sum(partials[:, 1])
    l1_sum = jnp.sum(partials[:, 2])

    # average_factor = max(1, center_true.eq(1).sum())
    avg = jnp.maximum(jnp.float32(1.0), pos_cnt)
    return center_sum / (avg + F32_EPS) + l1_sum / (avg * 2.0 + F32_EPS)


# ----------------------------------------------------------------------------
# Pure-numpy reference of ComputeLoss.forward (for verification).
# ----------------------------------------------------------------------------
def compute_loss_ref(center_out, wh_out, off_out,
                     center_true, wh_true, off_true, weight):
    eps = 1e-12
    avg = max(1.0, float((center_true == 1.0).sum()))
    pos_w = (center_true == 1.0).astype(np.float32)
    neg_w = (1.0 - center_true) ** 4
    neg_loss = -np.log(1.0 - center_out + eps) * center_out ** 2 * neg_w
    pos_loss = -np.log(center_out + eps) * (1.0 - center_out) ** 2 * pos_w
    loss_center = (pos_loss + neg_loss).sum() / (avg + F32_EPS)
    loss_wh = 0.1 * (np.abs(wh_out - wh_true) * weight).sum() / (avg * 2 + F32_EPS)
    loss_off = 1.0 * (np.abs(off_out - off_true) * weight).sum() / (avg * 2 + F32_EPS)
    return loss_center + loss_wh + loss_off


if __name__ == "__main__":
    # Small, deterministic configuration.
    B, NUM_CLASSES, H, W = 2, 4, 16, 16
    INPUT_SIZE = 64  # so the H/W ratio is 0.25

    key = jax.random.PRNGKey(0)
    k1, k2, k3 = jax.random.split(key, 3)
    # Model outputs (NCHW): center heatmap in (0,1), raw wh / offset maps.
    center_out = jax.random.uniform(k1, (B, NUM_CLASSES, H, W),
                                    dtype=jnp.float32, minval=0.01, maxval=0.99)
    wh_out = jax.random.uniform(k2, (B, 2, H, W), dtype=jnp.float32,
                                minval=0.0, maxval=8.0)
    off_out = jax.random.uniform(k3, (B, 2, H, W), dtype=jnp.float32,
                                 minval=0.0, maxval=1.0)

    # Ground-truth boxes per image: [label, x1, y1, x2, y2] in input coords.
    targets_list = [
        np.array([[0, 4.0, 8.0, 36.0, 40.0],
                  [2, 20.0, 10.0, 60.0, 50.0]], dtype=np.float32),
        np.array([[1, 0.0, 0.0, 30.0, 28.0],
                  [3, 32.0, 30.0, 62.0, 60.0],
                  [0, 10.0, 34.0, 50.0, 62.0]], dtype=np.float32),
    ]
    center_true, wh_true, off_true, wh_offset_weight = build_targets(
        targets_list, (B, NUM_CLASSES, H, W), INPUT_SIZE, NUM_CLASSES)

    loss = compute_loss_pallas(
        center_out, wh_out, off_out,
        jnp.asarray(center_true), jnp.asarray(wh_true),
        jnp.asarray(off_true), jnp.asarray(wh_offset_weight))
    loss = jax.block_until_ready(loss)

    ref = compute_loss_ref(np.asarray(center_out), np.asarray(wh_out),
                           np.asarray(off_out), center_true, wh_true,
                           off_true, wh_offset_weight)
    assert np.isfinite(float(loss))
    assert abs(float(loss) - float(ref)) <= 1e-3 * (abs(float(ref)) + 1e-6), \
        (float(loss), float(ref))
    print("KERNEL_OK")
</pallas_src>

<mosaic_0001>
module attributes {stable_mosaic.version = 11 : i64} {
  func.func @kernel(%arg0: i32, %arg1: i32, %arg2: memref<8x256xf32, #tpu.memory_space<vmem>>, %arg3: memref<8x256xf32, #tpu.memory_space<vmem>>, %arg4: memref<8x256xf32, #tpu.memory_space<vmem>>, %arg5: memref<8x256xf32, #tpu.memory_space<vmem>>, %arg6: memref<8x256xf32, #tpu.memory_space<vmem>>, %arg7: memref<8x256xf32, #tpu.memory_space<vmem>>, %arg8: memref<8x256xf32, #tpu.memory_space<vmem>>, %arg9: memref<1x128xf32, #tpu.memory_space<vmem>>, %arg10: memref<8x256xf32, #tpu.memory_space<vmem>>, %arg11: memref<8x256xf32, #tpu.memory_space<vmem>>, %arg12: memref<8x256xf32, #tpu.memory_space<vmem>>) attributes {dimension_semantics = [#tpu.dimension_semantics<parallel>, #tpu.dimension_semantics<arbitrary>], iteration_bounds = array<i64: 1, 1>, scalar_prefetch = 0 : i64, scratch_operands = 3 : i64, tpu.core_type = #tpu.core_type<tc>, window_params = [{transform_indices = @transform_0, window_bounds = array<i64: 8, 256>}, {transform_indices = @transform_1, window_bounds = array<i64: 8, 256>}, {transform_indices = @transform_2, window_bounds = array<i64: 8, 256>}, {transform_indices = @transform_3, window_bounds = array<i64: 8, 256>}, {transform_indices = @transform_4, window_bounds = array<i64: 8, 256>}, {transform_indices = @transform_5, window_bounds = array<i64: 8, 256>}, {transform_indices = @transform_6, window_bounds = array<i64: 8, 256>}, {transform_indices = @transform_7, window_bounds = array<i64: 1, 128>}]} {
    %c0_i32 = arith.constant 0 : i32
    %0 = arith.cmpi eq, %arg1, %c0_i32 : i32
    %1 = arith.extui %0 : i1 to i32
    %c0_i32_0 = arith.constant 0 : i32
    %2 = arith.cmpi ne, %1, %c0_i32_0 : i32
    scf.if %2 {
      %cst_19 = arith.constant 0.000000e+00 : f32
      %39 = vector.broadcast %cst_19 : f32 to vector<8x256xf32>
      %c0_20 = arith.constant 0 : index
      %c0_21 = arith.constant 0 : index
      %40 = vector.load %arg10[%c0_20, %c0_21] : memref<8x256xf32, #tpu.memory_space<vmem>>, vector<8x256xf32>
      tpu.vector_store %arg10[%c0_20, %c0_21], %39 {strides = array<i32>} : memref<8x256xf32, #tpu.memory_space<vmem>>, vector<8x256xf32>,
      %cst_22 = arith.constant 0.000000e+00 : f32
      %41 = vector.broadcast %cst_22 : f32 to vector<8x256xf32>
      %c0_23 = arith.constant 0 : index
      %c0_24 = arith.constant 0 : index
      %42 = vector.load %arg11[%c0_23, %c0_24] : memref<8x256xf32, #tpu.memory_space<vmem>>, vector<8x256xf32>
      tpu.vector_store %arg11[%c0_23, %c0_24], %41 {strides = array<i32>} : memref<8x256xf32, #tpu.memory_space<vmem>>, vector<8x256xf32>,
      %cst_25 = arith.constant 0.000000e+00 : f32
      %43 = vector.broadcast %cst_25 : f32 to vector<8x256xf32>
      %c0_26 = arith.constant 0 : index
      %c0_27 = arith.constant 0 : index
      %44 = vector.load %arg12[%c0_26, %c0_27] : memref<8x256xf32, #tpu.memory_space<vmem>>, vector<8x256xf32>
      tpu.vector_store %arg12[%c0_26, %c0_27], %43 {strides = array<i32>} : memref<8x256xf32, #tpu.memory_space<vmem>>, vector<8x256xf32>,
    } else {
    }
    %c1_i32 = arith.constant 1 : i32
    %3 = arith.cmpi slt, %arg1, %c1_i32 : i32
    %4 = arith.extui %3 : i1 to i32
    %c0_i32_1 = arith.constant 0 : i32
    %5 = arith.cmpi ne, %4, %c0_i32_1 : i32
    scf.if %5 {
      %c0_19 = arith.constant 0 : index
      %c0_20 = arith.constant 0 : index
      %39 = vector.load %arg4[%c0_19, %c0_20] : memref<8x256xf32, #tpu.memory_space<vmem>>, vector<8x256xf32>
      %c0_21 = arith.constant 0 : index
      %c0_22 = arith.constant 0 : index
      %40 = vector.load %arg5[%c0_21, %c0_22] : memref<8x256xf32, #tpu.memory_space<vmem>>, vector<8x256xf32>
      %41 = arith.subf %39, %40 : vector<8x256xf32>
      %42 = math.absf %41 : vector<8x256xf32>
      %cst_23 = arith.constant 1.000000e-01 : f32
      %43 = vector.broadcast %cst_23 : f32 to vector<8x256xf32>
      %44 = arith.mulf %43, %42 : vector<8x256xf32>
      %c0_24 = arith.constant 0 : index
      %c0_25 = arith.constant 0 : index
      %45 = vector.load %arg6[%c0_24, %c0_25] : memref<8x256xf32, #tpu.memory_space<vmem>>, vector<8x256xf32>
      %c0_26 = arith.constant 0 : index
      %c0_27 = arith.constant 0 : index
      %46 = vector.load %arg7[%c0_26, %c0_27] : memref<8x256xf32, #tpu.memory_space<vmem>>, vector<8x256xf32>
      %47 = arith.subf %45, %46 : vector<8x256xf32>
      %48 = math.absf %47 : vector<8x256xf32>
      %49 = arith.addf %44, %48 : vector<8x256xf32>
      %c0_28 = arith.constant 0 : index
      %c0_29 = arith.constant 0 : index
      %50 = vector.load %arg8[%c0_28, %c0_29] : memref<8x256xf32, #tpu.memory_space<vmem>>, vector<8x256xf32>
      %51 = arith.mulf %49, %50 : vector<8x256xf32>
      %c0_30 = arith.constant 0 : index
      %c0_31 = arith.constant 0 : index
      %52 = vector.load %arg12[%c0_30, %c0_31] : memref<8x256xf32, #tpu.memory_space<vmem>>, vector<8x256xf32>
      %53 = arith.addf %52, %51 : vector<8x256xf32>
      %c0_32 = arith.constant 0 : index
      %c0_33 = arith.constant 0 : index
      %54 = vector.load %arg12[%c0_32, %c0_33] : memref<8x256xf32, #tpu.memory_space<vmem>>, vector<8x256xf32>
      tpu.vector_store %arg12[%c0_32, %c0_33], %53 {strides = array<i32>} : memref<8x256xf32, #tpu.memory_space<vmem>>, vector<8x256xf32>,
    } else {
    }
    %c0 = arith.constant 0 : index
    %c0_2 = arith.constant 0 : index
    %6 = vector.load %arg2[%c0, %c0_2] : memref<8x256xf32, #tpu.memory_space<vmem>>, vector<8x256xf32>
    %c0_3 = arith.constant 0 : index
    %c0_4 = arith.constant 0 : index
    %7 = vector.load %arg3[%c0_3, %c0_4] : memref<8x256xf32, #tpu.memory_space<vmem>>, vector<8x256xf32>
    %cst = arith.constant 1.000000e+00 : f32
    %8 = vector.broadcast %cst : f32 to vector<8x256xf32>
    %9 = arith.cmpf oeq, %7, %8 : vector<8x256xf32>
    %cst_5 = arith.constant 1.000000e+00 : f32
    %10 = vector.broadcast %cst_5 : f32 to vector<8x256xf32>
    %11 = arith.subf %10, %6 : vector<8x256xf32>
    %cst_6 = arith.constant 1.000000e+00 : f32
    %12 = vector.broadcast %cst_6 : f32 to vector<8x256xf32>
    %13 = arith.subf %12, %7 : vector<8x256xf32>
    %14 = arith.mulf %13, %13 : vector<8x256xf32>
    %15 = arith.mulf %13, %13 : vector<8x256xf32>
    %16 = arith.mulf %14, %15 : vector<8x256xf32>
    %17 = arith.select %9, %6, %11 : vector<8x256xi1>, vector<8x256xf32>
    %18 = arith.mulf %11, %11 : vector<8x256xf32>
    %19 = arith.mulf %6, %6 : vector<8x256xf32>
    %20 = arith.mulf %19, %16 : vector<8x256xf32>
    %21 = arith.select %9, %18, %20 : vector<8x256xi1>, vector<8x256xf32>
    %cst_7 = arith.constant 9.99999996E-13 : f32
    %22 = vector.broadcast %cst_7 : f32 to vector<8x256xf32>
    %23 = arith.addf %17, %22 : vector<8x256xf32>
    %24 = math.log %23 : vector<8x256xf32>
    %cst_8 = arith.constant 0.000000e+00 : f32
    %25 = vector.broadcast %cst_8 : f32 to vector<8x256xf32>
    %26 = arith.subf %25, %24 : vector<8x256xf32>
    %27 = arith.mulf %26, %21 : vector<8x256xf32>
    %c0_9 = arith.constant 0 : index
    %c0_10 = arith.constant 0 : index
    %28 = vector.load %arg10[%c0_9, %c0_10] : memref<8x256xf32, #tpu.memory_space<vmem>>, vector<8x256xf32>
    %29 = arith.addf %28, %27 : vector<8x256xf32>
    %c0_11 = arith.constant 0 : index
    %c0_12 = arith.constant 0 : index
    %30 = vector.load %arg10[%c0_11, %c0_12] : memref<8x256xf32, #tpu.memory_space<vmem>>, vector<8x256xf32>
    tpu.vector_store %arg10[%c0_11, %c0_12], %29 {strides = array<i32>} : memref<8x256xf32, #tpu.memory_space<vmem>>, vector<8x256xf32>,
    %c0_13 = arith.constant 0 : index
    %c0_14 = arith.constant 0 : index
    %31 = vector.load %arg11[%c0_13, %c0_14] : memref<8x256xf32, #tpu.memory_space<vmem>>, vector<8x256xf32>
    %32 = arith.extui %9 : vector<8x256xi1> to vector<8x256xi32>
    %33 = arith.sitofp %32 : vector<8x256xi32> to vector<8x256xf32>
    %34 = arith.addf %31, %33 : vector<8x256xf32>
    %c0_15 = arith.constant 0 : index
    %c0_16 = arith.constant 0 : index
    %35 = vector.load %arg11[%c0_15, %c0_16] : memref<8x256xf32, #tpu.memory_space<vmem>>, vector<8x256xf32>
    tpu.vector_store %arg11[%c0_15, %c0_16], %34 {strides = array<i32>} : memref<8x256xf32, #tpu.memory_space<vmem>>, vector<8x256xf32>,
    %c0_i32_17 = arith.constant 0 : i32
    %36 = arith.cmpi eq, %arg1, %c0_i32_17 : i32
    %37 = arith.extui %36 : i1 to i32
    %c0_i32_18 = arith.constant 0 : i32
    %38 = arith.cmpi ne, %37, %c0_i32_18 : i32
    scf.if %38 {
      %c0_19 = arith.constant 0 : index
      %c0_20 = arith.constant 0 : index
      %39 = vector.load %arg10[%c0_19, %c0_20] : memref<8x256xf32, #tpu.memory_space<vmem>>, vector<8x256xf32>
      %40 = vector.shape_cast %39 : vector<8x256xf32> to vector<1x8x256xf32>
      %cst_21 = arith.constant dense<0.000000e+00> : vector<1xf32>
      %41 = vector.multi_reduction <add>, %40, %cst_21 [1, 2] : vector<1x8x256xf32> to vector<1xf32>
      %42 = vector.shape_cast %41 : vector<1xf32> to vector<1x1x1xf32>
      %43 = vector.extract %42[0, 0, 0] : f32 from vector<1x1x1xf32>
      %c0_22 = arith.constant 0 : index
      %c0_23 = arith.constant 0 : index
      %44 = vector.load %arg11[%c0_22, %c0_23] : memref<8x256xf32, #tpu.memory_space<vmem>>, vector<8x256xf32>
      %45 = vector.shape_cast %44 : vector<8x256xf32> to vector<1x8x256xf32>
      %cst_24 = arith.constant dense<0.000000e+00> : vector<1xf32>
      %46 = vector.multi_reduction <add>, %45, %cst_24 [1, 2] : vector<1x8x256xf32> to vector<1xf32>
      %47 = vector.shape_cast %46 : vector<1xf32> to vector<1x1x1xf32>
      %48 = vector.extract %47[0, 0, 0] : f32 from vector<1x1x1xf32>
      %c0_25 = arith.constant 0 : index
      %c0_26 = arith.constant 0 : index
      %49 = vector.load %arg12[%c0_25, %c0_26] : memref<8x256xf32, #tpu.memory_space<vmem>>, vector<8x256xf32>
      %50 = vector.shape_cast %49 : vector<8x256xf32> to vector<1x8x256xf32>
      %cst_27 = arith.constant dense<0.000000e+00> : vector<1xf32>
      %51 = vector.multi_reduction <add>, %50, %cst_27 [1, 2] : vector<1x8x256xf32> to vector<1xf32>
      %52 = vector.shape_cast %51 : vector<1xf32> to vector<1x1x1xf32>
      %53 = vector.extract %52[0, 0, 0] : f32 from vector<1x1x1xf32>
      %54 = tpu.iota {dimensions = array<i32: 1>} : vector<1x128xi32>
      %c0_i32_28 = arith.constant 0 : i32
      %55 = vector.broadcast %c0_i32_28 : i32 to vector<1x128xi32>
      %56 = arith.cmpi eq, %54, %55 : vector<1x128xi32>
      %c1_i32_29 = arith.constant 1 : i32
      %57 = vector.broadcast %c1_i32_29 : i32 to vector<1x128xi32>
      %58 = arith.cmpi eq, %54, %57 : vector<1x128xi32>
      %c2_i32 = arith.constant 2 : i32
      %59 = vector.broadcast %c2_i32 : i32 to vector<1x128xi32>
      %60 = arith.cmpi eq, %54, %59 : vector<1x128xi32>
      %cst_30 = arith.constant 0.000000e+00 : f32
      %61 = vector.broadcast %53 : f32 to vector<1x128xf32>
      %62 = vector.broadcast %cst_30 : f32 to vector<1x128xf32>
      %63 = arith.select %60, %61, %62 : vector<1x128xi1>, vector<1x128xf32>
      %64 = vector.broadcast %48 : f32 to vector<1x128xf32>
      %65 = arith.select %58, %64, %63 : vector<1x128xi1>, vector<1x128xf32>
      %66 = vector.broadcast %43 : f32 to vector<1x128xf32>
      %67 = arith.select %56, %66, %65 : vector<1x128xi1>, vector<1x128xf32>
      %c0_31 = arith.constant 0 : index
      %c0_32 = arith.constant 0 : index
      %68 = vector.load %arg9[%c0_31, %c0_32] : memref<1x128xf32, #tpu.memory_space<vmem>>, vector<1x128xf32>
      tpu.vector_store %arg9[%c0_31, %c0_32], %67 {strides = array<i32>} : memref<1x128xf32, #tpu.memory_space<vmem>>, vector<1x128xf32>,
    } else {
    }
    return
  }
  func.func @transform_0(%arg0: i32, %arg1: i32) -> (i32, i32) {
    %c1_i32 = arith.constant 1 : i32
    %0 = arith.muli %arg0, %c1_i32 : i32
    %1 = arith.addi %0, %arg1 : i32
    %c0_i32 = arith.constant 0 : i32
    %c0_i32_0 = arith.constant 0 : i32
    return %1, %c0_i32 : i32, i32
  }
  func.func @transform_1(%arg0: i32, %arg1: i32) -> (i32, i32) {
    %c1_i32 = arith.constant 1 : i32
    %0 = arith.muli %arg0, %c1_i32 : i32
    %1 = arith.addi %0, %arg1 : i32
    %c0_i32 = arith.constant 0 : i32
    %c0_i32_0 = arith.constant 0 : i32
    return %1, %c0_i32 : i32, i32
  }
  func.func @transform_2(%arg0: i32, %arg1: i32) -> (i32, i32) {
    %c1_i32 = arith.constant 1 : i32
    %0 = arith.muli %arg0, %c1_i32 : i32
    %c0_i32 = arith.constant 0 : i32
    %1 = arith.minsi %arg1, %c0_i32 : i32
    %2 = arith.addi %0, %1 : i32
    %c0_i32_0 = arith.constant 0 : i32
    %c0_i32_1 = arith.constant 0 : i32
    return %2, %c0_i32_0 : i32, i32
  }
  func.func @transform_3(%arg0: i32, %arg1: i32) -> (i32, i32) {
    %c1_i32 = arith.constant 1 : i32
    %0 = arith.muli %arg0, %c1_i32 : i32
    %c0_i32 = arith.constant 0 : i32
    %1 = arith.minsi %arg1, %c0_i32 : i32
    %2 = arith.addi %0, %1 : i32
    %c0_i32_0 = arith.constant 0 : i32
    %c0_i32_1 = arith.constant 0 : i32
    return %2, %c0_i32_0 : i32, i32
  }
  func.func @transform_4(%arg0: i32, %arg1: i32) -> (i32, i32) {
    %c1_i32 = arith.constant 1 : i32
    %0 = arith.muli %arg0, %c1_i32 : i32
    %c0_i32 = arith.constant 0 : i32
    %1 = arith.minsi %arg1, %c0_i32 : i32
    %2 = arith.addi %0, %1 : i32
    %c0_i32_0 = arith.constant 0 : i32
    %c0_i32_1 = arith.constant 0 : i32
    return %2, %c0_i32_0 : i32, i32
  }
  func.func @transform_5(%arg0: i32, %arg1: i32) -> (i32, i32) {
    %c1_i32 = arith.constant 1 : i32
    %0 = arith.muli %arg0, %c1_i32 : i32
    %c0_i32 = arith.constant 0 : i32
    %1 = arith.minsi %arg1, %c0_i32 : i32
    %2 = arith.addi %0, %1 : i32
    %c0_i32_0 = arith.constant 0 : i32
    %c0_i32_1 = arith.constant 0 : i32
    return %2, %c0_i32_0 : i32, i32
  }
  func.func @transform_6(%arg0: i32, %arg1: i32) -> (i32, i32) {
    %c1_i32 = arith.constant 1 : i32
    %0 = arith.muli %arg0, %c1_i32 : i32
    %c0_i32 = arith.constant 0 : i32
    %1 = arith.minsi %arg1, %c0_i32 : i32
    %2 = arith.addi %0, %1 : i32
    %c0_i32_0 = arith.constant 0 : i32
    %c0_i32_1 = arith.constant 0 : i32
    return %2, %c0_i32_0 : i32, i32
  }
  func.func @transform_7(%arg0: i32, %arg1: i32) -> (i32, i32) {
    %c0_i32 = arith.constant 0 : i32
    %c0_i32_0 = arith.constant 0 : i32
    return %c0_i32, %arg0 : i32, i32
  }
}

</mosaic_0001>

<llo_original>
// kernel: compute_loss_pallas.1
$region0: #{compute_loss_pallas.1}
  #allocation0 [shape = 'u32[]', space=smem, size = 0x4, offset = 0x4, fixed_abs, tag = 'smem constant byte address 0x4 - core index']
  #allocation1 [shape = 'u32[72,128]{1,0:T(1,128)}', space=vmem, size = 0x9000, scoped, tag = 'internal scratch']
  #allocation2 [shape = 'f32[8,256]{1,0:T(8,128)}', space=vmem, size = 0x2000, scoped, tag = 'scratch operand']
  #allocation3 [shape = 'f32[8,256]{1,0:T(8,128)}', space=vmem, size = 0x2000, scoped, tag = 'scratch operand']
  #allocation4 [shape = 'f32[8,256]{1,0:T(8,128)}', space=vmem, size = 0x2000, scoped, tag = 'scratch operand']
  %s0 = inlined_call_operand.vmem [shape: f32[8,256], index: 0, kind: input, shape index: {}]
  %s1 = inlined_call_operand.vmem [shape: f32[8,256], index: 1, kind: input, shape index: {}]
  %s2 = inlined_call_operand.vmem [shape: f32[8,256], index: 2, kind: input, shape index: {}]
  %s3 = inlined_call_operand.vmem [shape: f32[8,256], index: 3, kind: input, shape index: {}]
  %s4 = inlined_call_operand.vmem [shape: f32[8,256], index: 4, kind: input, shape index: {}]
  %s5 = inlined_call_operand.vmem [shape: f32[8,256], index: 5, kind: input, shape index: {}]
  %s6 = inlined_call_operand.vmem [shape: f32[8,256], index: 6, kind: input, shape index: {}]
  %s7 = inlined_call_operand.vmem [shape: f32[1,128], index: 7, kind: output, shape index: {}]
  %s8 = sld [smem:[#allocation0]]
  $region50: #{compute_loss_pallas.1} parent=0
    _
  %s10 = ssub.s32 1, %s8
  %s11 = scalar_select 0, %s10, %s8
  // Predicated region
  $region2: #{compute_loss_pallas.1} parent=0 // pred_check
    _
  $region3: #{compute_loss_pallas.1} parent=0 // pred_check_branch
    %13 = sbr.rel (0) target = $region5
  $region4: #{compute_loss_pallas.1} parent=0 // pred_region
    %s14 = sadd.s32 0, 0
    %p15 = scmp.lt.s32.totalorder %s14, 0
    %s16 = scalar_select %p15, %s14, 0
    %s17 = smul.addr %s16, 2
    %s18 = smul.addr %s17, 8
    %s19 = scalar_lea.vmem %s0, %s18
    %s20 = sadd.s32 0, 0
  $region5: #{compute_loss_pallas.1} parent=0 // pred_fallthru
    _
  // Predicated region
  $region6: #{compute_loss_pallas.1} parent=0 // pred_check
    _
  $region7: #{compute_loss_pallas.1} parent=0 // pred_check_branch
    %22 = sbr.rel (0) target = $region9
  $region8: #{compute_loss_pallas.1} parent=0 // pred_region
    %s23 = sadd.s32 0, 0
    %p24 = scmp.lt.s32.totalorder %s23, 0
    %s25 = scalar_select %p24, %s23, 0
    %s26 = smul.addr %s25, 2
    %s27 = smul.addr %s26, 8
    %s28 = scalar_lea.vmem %s1, %s27
    %s29 = sadd.s32 0, 0
  $region9: #{compute_loss_pallas.1} parent=0 // pred_fallthru
    _
  // Predicated region
  $region10: #{compute_loss_pallas.1} parent=0 // pred_check
    _
  $region11: #{compute_loss_pallas.1} parent=0 // pred_check_branch
    %31 = sbr.rel (0) target = $region13
  $region12: #{compute_loss_pallas.1} parent=0 // pred_region
    %s32 = sadd.s32 0, 0
    %p33 = scmp.lt.s32.totalorder %s32, 0
    %s34 = scalar_select %p33, %s32, 0
    %s35 = smul.addr %s34, 2
    %s36 = smul.addr %s35, 8
    %s37 = scalar_lea.vmem %s2, %s36
    %s38 = sadd.s32 0, 0
  $region13: #{compute_loss_pallas.1} parent=0 // pred_fallthru
    _
  // Predicated region
  $region14: #{compute_loss_pallas.1} parent=0 // pred_check
    _
  $region15: #{compute_loss_pallas.1} parent=0 // pred_check_branch
    %40 = sbr.rel (0) target = $region17
  $region16: #{compute_loss_pallas.1} parent=0 // pred_region
    %s41 = sadd.s32 0, 0
    %p42 = scmp.lt.s32.totalorder %s41, 0
    %s43 = scalar_select %p42, %s41, 0
    %s44 = smul.addr %s43, 2
    %s45 = smul.addr %s44, 8
    %s46 = scalar_lea.vmem %s3, %s45
    %s47 = sadd.s32 0, 0
  $region17: #{compute_loss_pallas.1} parent=0 // pred_fallthru
    _
  // Predicated region
  $region18: #{compute_loss_pallas.1} parent=0 // pred_check
    _
  $region19: #{compute_loss_pallas.1} parent=0 // pred_check_branch
    %49 = sbr.rel (0) target = $region21
  $region20: #{compute_loss_pallas.1} parent=0 // pred_region
    %s50 = sadd.s32 0, 0
    %p51 = scmp.lt.s32.totalorder %s50, 0
    %s52 = scalar_select %p51, %s50, 0
    %s53 = smul.addr %s52, 2
    %s54 = smul.addr %s53, 8
    %s55 = scalar_lea.vmem %s4, %s54
    %s56 = sadd.s32 0, 0
  $region21: #{compute_loss_pallas.1} parent=0 // pred_fallthru
    _
  // Predicated region
  $region22: #{compute_loss_pallas.1} parent=0 // pred_check
    _
  $region23: #{compute_loss_pallas.1} parent=0 // pred_check_branch
    %58 = sbr.rel (0) target = $region25
  $region24: #{compute_loss_pallas.1} parent=0 // pred_region
    %s59 = sadd.s32 0, 0
    %p60 = scmp.lt.s32.totalorder %s59, 0
    %s61 = scalar_select %p60, %s59, 0
    %s62 = smul.addr %s61, 2
    %s63 = smul.addr %s62, 8
    %s64 = scalar_lea.vmem %s5, %s63
    %s65 = sadd.s32 0, 0
  $region25: #{compute_loss_pallas.1} parent=0 // pred_fallthru
    _
  // Predicated region
  $region26: #{compute_loss_pallas.1} parent=0 // pred_check
    _
  $region27: #{compute_loss_pallas.1} parent=0 // pred_check_branch
    %67 = sbr.rel (0) target = $region29
  $region28: #{compute_loss_pallas.1} parent=0 // pred_region
    %s68 = sadd.s32 0, 0
    %p69 = scmp.lt.s32.totalorder %s68, 0
    %s70 = scalar_select %p69, %s68, 0
    %s71 = smul.addr %s70, 2
    %s72 = smul.addr %s71, 8
    %s73 = scalar_lea.vmem %s6, %s72
    %s74 = sadd.s32 0, 0
  $region29: #{compute_loss_pallas.1} parent=0 // pred_fallthru
    _
  %s75 = sadd.s32 0, 0
  %p76 = scmp.lt.s32.totalorder %s75, 0
  %s77 = scalar_select %p76, %s75, 0
  %s78 = smul.addr %s77, 2
  %s79 = smul.addr %s78, 8
  %s80 = scalar_lea.vmem %s0, %s79
  %s81 = sadd.s32 0, 0
  %p82 = scmp.lt.s32.totalorder %s81, 0
  %s83 = scalar_select %p82, %s81, 0
  %s84 = smul.addr %s83, 2
  %s85 = smul.addr %s84, 8
  %s86 = scalar_lea.vmem %s1, %s85
  %s87 = sadd.s32 0, 0
  %p88 = scmp.lt.s32.totalorder %s87, 0
  %s89 = scalar_select %p88, %s87, 0
  %s90 = smul.addr %s89, 2
  %s91 = smul.addr %s90, 8
  %s92 = scalar_lea.vmem %s2, %s91
  %s93 = sadd.s32 0, 0
  %p94 = scmp.lt.s32.totalorder %s93, 0
  %s95 = scalar_select %p94, %s93, 0
  %s96 = smul.addr %s95, 2
  %s97 = smul.addr %s96, 8
  %s98 = scalar_lea.vmem %s3, %s97
  %s99 = sadd.s32 0, 0
  %p100 = scmp.lt.s32.totalorder %s99, 0
  %s101 = scalar_select %p100, %s99, 0
  %s102 = smul.addr %s101, 2
  %s103 = smul.addr %s102, 8
  %s104 = scalar_lea.vmem %s4, %s103
  %s105 = sadd.s32 0, 0
  %p106 = scmp.lt.s32.totalorder %s105, 0
  %s107 = scalar_select %p106, %s105, 0
  %s108 = smul.addr %s107, 2
  %s109 = smul.addr %s108, 8
  %s110 = scalar_lea.vmem %s5, %s109
  %s111 = sadd.s32 0, 0
  %p112 = scmp.lt.s32.totalorder %s111, 0
  %s113 = scalar_select %p112, %s111, 0
  %s114 = smul.addr %s113, 2
  %s115 = smul.addr %s114, 8
  %s116 = scalar_lea.vmem %s6, %s115
  %s117 = sadd.s32 0, 0
  %p118 = scmp.lt.s32.totalorder %s117, 0
  %s119 = scalar_select %p118, %s117, 0
  %s120 = smul.addr %s119, 2
  %s121 = smul.addr %s120, 8
  %s122 = scalar_lea.vmem %s0, %s121
  %s123 = sadd.s32 0, 0
  %s124 = sadd.s32 0, 0
  %p125 = scmp.lt.s32.totalorder %s124, 0
  %s126 = scalar_select %p125, %s124, 0
  %s127 = smul.addr %s126, 2
  %s128 = smul.addr %s127, 8
  %s129 = scalar_lea.vmem %s1, %s128
  %s130 = sadd.s32 0, 0
  %s131 = sadd.s32 0, 0
  %p132 = scmp.lt.s32.totalorder %s131, 0
  %s133 = scalar_select %p132, %s131, 0
  %s134 = smul.addr %s133, 2
  %s135 = smul.addr %s134, 8
  %s136 = scalar_lea.vmem %s2, %s135
  %s137 = sadd.s32 0, 0
  %s138 = sadd.s32 0, 0
  %p139 = scmp.lt.s32.totalorder %s138, 0
  %s140 = scalar_select %p139, %s138, 0
  %s141 = smul.addr %s140, 2
  %s142 = smul.addr %s141, 8
  %s143 = scalar_lea.vmem %s3, %s142
  %s144 = sadd.s32 0, 0
  %s145 = sadd.s32 0, 0
  %p146 = scmp.lt.s32.totalorder %s145, 0
  %s147 = scalar_select %p146, %s145, 0
  %s148 = smul.addr %s147, 2
  %s149 = smul.addr %s148, 8
  %s150 = scalar_lea.vmem %s4, %s149
  %s151 = sadd.s32 0, 0
  %s152 = sadd.s32 0, 0
  %p153 = scmp.lt.s32.totalorder %s152, 0
  %s154 = scalar_select %p153, %s152, 0
  %s155 = smul.addr %s154, 2
  %s156 = smul.addr %s155, 8
  %s157 = scalar_lea.vmem %s5, %s156
  %s158 = sadd.s32 0, 0
  %s159 = sadd.s32 0, 0
  %p160 = scmp.lt.s32.totalorder %s159, 0
  %s161 = scalar_select %p160, %s159, 0
  %s162 = smul.addr %s161, 2
  %s163 = smul.addr %s162, 8
  %s164 = scalar_lea.vmem %s6, %s163
  %s165 = sadd.s32 0, 0
  %p166 = scmp.eq.s32.totalorder 0, 0
  // Predicated region
  $region30: #{compute_loss_pallas.1} parent=0 // pred_check
    %p167 = pneg %p166
  $region31: #{compute_loss_pallas.1} parent=0 // pred_check_branch
    %169 = sbr.rel (%p167) target = $region33
  $region32: #{compute_loss_pallas.1} parent=0 // pred_region
    %170 = vst [vmem:[#allocation2] sm:$0xff] 0.0
    %171 = vst [vmem:[#allocation2 + $0x8] sm:$0xff] 0.0
    %172 = vst [vmem:[#allocation3] sm:$0xff] 0.0
    %173 = vst [vmem:[#allocation3 + $0x8] sm:$0xff] 0.0
    %174 = vst [vmem:[#allocation4] sm:$0xff] 0.0
    %175 = vst [vmem:[#allocation4 + $0x8] sm:$0xff] 0.0
  $region33: #{compute_loss_pallas.1} parent=0 // pred_fallthru
    _
  %p176 = scmp.lt.s32.totalorder 0, 1
  // Predicated region
  $region34: #{compute_loss_pallas.1} parent=0 // pred_check
    %p177 = pneg %p176
  $region35: #{compute_loss_pallas.1} parent=0 // pred_check_branch
    %179 = sbr.rel (%p177) target = $region37
  $region36: #{compute_loss_pallas.1} parent=0 // pred_region
    %v180 = vld [vmem:[%s136] sm:$0xff]
    %v181 = vld [vmem:[%s136 + $0x8] sm:$0xff]
    %v182 = vld [vmem:[%s143] sm:$0xff]
    %v183 = vld [vmem:[%s143 + $0x8] sm:$0xff]
    %v184 = vsub.f32 %v180, %v182
    %v185 = vsub.f32 %v181, %v183
    %v186 = vand.u32 2147483647, %v184
    %v187 = vand.u32 2147483647, %v185
    %v188 = vmul.f32 %v186, 0.1
    %v189 = vmul.f32 %v187, 0.1
    %v190 = vld [vmem:[%s150] sm:$0xff]
    %v191 = vld [vmem:[%s150 + $0x8] sm:$0xff]
    %v192 = vld [vmem:[%s157] sm:$0xff]
    %v193 = vld [vmem:[%s157 + $0x8] sm:$0xff]
    %v194 = vsub.f32 %v190, %v192
    %v195 = vsub.f32 %v191, %v193
    %v196 = vand.u32 2147483647, %v194
    %v197 = vand.u32 2147483647, %v195
    %v198 = vadd.f32 %v188, %v196
    %v199 = vadd.f32 %v189, %v197
    %v200 = vld [vmem:[%s164] sm:$0xff]
    %v201 = vld [vmem:[%s164 + $0x8] sm:$0xff]
    %v202 = vmul.f32 %v198, %v200
    %v203 = vmul.f32 %v199, %v201
    %v204 = vld [vmem:[#allocation4] sm:$0xff]
    %v205 = vld [vmem:[#allocation4 + $0x8] sm:$0xff]
    %v206 = vadd.f32 %v204, %v202
    %v207 = vadd.f32 %v205, %v203
    %208 = vst [vmem:[#allocation4] sm:$0xff] %v206
    %209 = vst [vmem:[#allocation4 + $0x8] sm:$0xff] %v207
  $region37: #{compute_loss_pallas.1} parent=0 // pred_fallthru
    _
  %v210 = vld [vmem:[%s122] sm:$0xff]
  %v211 = vld [vmem:[%s122 + $0x8] sm:$0xff]
  %v212 = vld [vmem:[%s129] sm:$0xff]
  %v213 = vld [vmem:[%s129 + $0x8] sm:$0xff]
  %vm214 = vcmp.eq.f32.partialorder %v212, 1.0
  %vm215 = vcmp.eq.f32.partialorder %v213, 1.0
  %v216 = vsub.f32 1.0, %v210
  %v217 = vsub.f32 1.0, %v211
  %v218 = vsub.f32 1.0, %v212
  %v219 = vsub.f32 1.0, %v213
  %v220 = vmul.f32 %v218, %v218
  %v221 = vmul.f32 %v219, %v219
  %v222 = vmul.f32 %v220, %v220
  %v223 = vmul.f32 %v221, %v221
  %v224 = vsel %vm214, %v210, %v216
  %v225 = vsel %vm215, %v211, %v217
  %v226 = vmul.f32 %v216, %v216
  %v227 = vmul.f32 %v217, %v217
  %v228 = vmul.f32 %v210, %v210
  %v229 = vmul.f32 %v211, %v211
  %v230 = vmul.f32 %v228, %v222
  %v231 = vmul.f32 %v229, %v223
  %v232 = vsel %vm214, %v226, %v230
  %v233 = vsel %vm215, %v227, %v231
  %v234 = vadd.f32 %v224, 1e-12
  %v235 = vadd.f32 %v225, 1e-12
  %v236 = vlog2.pop %v234
  %v237 = vmul.f32 %v236, 0.6931472
  %v238 = vlog2.pop %v235
  %v239 = vmul.f32 %v238, 0.6931472
  %v240 = vsub.f32 0.0, %v237
  %v241 = vsub.f32 0.0, %v239
  %v242 = vmul.f32 %v240, %v232
  %v243 = vmul.f32 %v241, %v233
  %v244 = vld [vmem:[#allocation2] sm:$0xff]
  %v245 = vld [vmem:[#allocation2 + $0x8] sm:$0xff]
  %v246 = vadd.f32 %v244, %v242
  %v247 = vadd.f32 %v245, %v243
  %248 = vst [vmem:[#allocation2] sm:$0xff] %v246
  %249 = vst [vmem:[#allocation2 + $0x8] sm:$0xff] %v247
  %v250 = vld [vmem:[#allocation3] sm:$0xff]
  %v251 = vld [vmem:[#allocation3 + $0x8] sm:$0xff]
  %v252 = vsel %vm214, 1, 0
  %v253 = vsel %vm215, 1, 0
  %v254 = vcvt.s32.f32 %v252
  %v255 = vcvt.s32.f32 %v253
  %v256 = vadd.f32 %v250, %v254
  %v257 = vadd.f32 %v251, %v255
  %258 = vst [vmem:[#allocation3] sm:$0xff] %v256
  %259 = vst [vmem:[#allocation3 + $0x8] sm:$0xff] %v257
  // Predicated region
  $region38: #{compute_loss_pallas.1} parent=0 // pred_check
    %p260 = pneg %p166
  $region39: #{compute_loss_pallas.1} parent=0 // pred_check_branch
    %262 = sbr.rel (%p260) target = $region41
  $region40: #{compute_loss_pallas.1} parent=0 // pred_region
    %v263 = vld [vmem:[#allocation2] sm:$0xff]
    %v264 = vld [vmem:[#allocation2 + $0x8] sm:$0xff]
    %v265 = vadd.f32 %v263, %v264
    %266 = vadd.xlane.f32.xlu0 %v265
    %v267 = vpop.xlane.xlu0 %266
    %v268 = vrot.slane %v267, 4
    %v269 = vadd.f32 %v267, %v268
    %v270 = vrot.slane %v269, 2
    %v271 = vadd.f32 %v269, %v270
    %v272 = vrot.slane %v271, 1
    %v273 = vadd.f32 %v271, %v272
    %s274 = vtos %v273
    %v275 = vld [vmem:[#allocation3] sm:$0xff]
    %v276 = vld [vmem:[#allocation3 + $0x8] sm:$0xff]
    %v277 = vadd.f32 %v275, %v276
    %278 = vadd.xlane.f32.xlu0 %v277
    %v279 = vpop.xlane.xlu0 %278
    %v280 = vrot.slane %v279, 4
    %v281 = vadd.f32 %v279, %v280
    %v282 = vrot.slane %v281, 2
    %v283 = vadd.f32 %v281, %v282
    %v284 = vrot.slane %v283, 1
    %v285 = vadd.f32 %v283, %v284
    %s286 = vtos %v285
    %v287 = vld [vmem:[#allocation4] sm:$0xff]
    %v288 = vld [vmem:[#allocation4 + $0x8] sm:$0xff]
    %v289 = vadd.f32 %v287, %v288
    %290 = vadd.xlane.f32.xlu0 %v289
    %v291 = vpop.xlane.xlu0 %290
    %v292 = vrot.slane %v291, 4
    %v293 = vadd.f32 %v291, %v292
    %v294 = vrot.slane %v293, 2
    %v295 = vadd.f32 %v293, %v294
    %v296 = vrot.slane %v295, 1
    %v297 = vadd.f32 %v295, %v296
    %s298 = vtos %v297
    %v299 = vlaneseq
    %v300 = vand.u32 %v299, 127
    %vm301 = vcmp.eq.s32.totalorder %v300, 0
    %vm302 = vcmp.eq.s32.totalorder %v300, 1
    %vm303 = vcmp.eq.s32.totalorder %v300, 2
    %v304 = vstv %s298
    %v305 = vsel %vm303, %v304, 0.0
    %v306 = vstv %s286
    %v307 = vsel %vm302, %v306, %v305
    %v308 = vstv %s274
    %v309 = vsel %vm301, %v308, %v307
    %310 = vst [vmem:[%s7] sm:$0x1] %v309
  $region41: #{compute_loss_pallas.1} parent=0 // pred_fallthru
    _
  // Predicated region
  $region42: #{compute_loss_pallas.1} parent=0 // pred_check
    _
  $region43: #{compute_loss_pallas.1} parent=0 // pred_check_branch
    %312 = sbr.rel (0) target = $region45
  $region44: #{compute_loss_pallas.1} parent=0 // pred_region
    _
  $region45: #{compute_loss_pallas.1} parent=0 // pred_fallthru
    _
  // Predicated region
  $region46: #{compute_loss_pallas.1} parent=0 // pred_check
    _
  $region47: #{compute_loss_pallas.1} parent=0 // pred_check_branch
    %314 = sbr.rel (0) target = $region49
  $region48: #{compute_loss_pallas.1} parent=0 // pred_region
    _
  $region49: #{compute_loss_pallas.1} parent=0 // pred_fallthru
    _

</llo_original>
